<compile_context>
chip_gen: v7x
topology: tpu7x:2x2x1
jax: 0.10.0
libtpu: 0.0.40
codegen_flags: <defaults>
</compile_context>

<pallas_src>
import functools

import jax
import jax.numpy as jnp
import numpy as np
from jax.experimental import pallas as pl
from jax.experimental.pallas import tpu as pltpu


# ----------------------------------------------------------------------------
# Kernels
# ----------------------------------------------------------------------------
def _structure_partials_kernel(logits_ref, tok_ref, out_ref, *, compute_entropy):
    """Per-sample partial reductions for one batch tile (full vocab per grid step).

    logits_ref: (tb, T, V)   model dtype (bf16/f32); element-wise math stays native
    tok_ref:    (tb, T, 2)   int32; [..., 0] = sampled token, [..., 1] = previous token
    out_ref:    (tb, 1, 128) f32;  lane 0 = sum_t picked*mask,
                                   lane 1 = sum_t entropy*mask, lane 2 = sum_t mask
    """
    x = logits_ref[...]                                    # native dtype, no full upcast
    seq = tok_ref[:, :, 0:1]                               # (tb, T, 1) int32
    prev = tok_ref[:, :, 1:2]                              # (tb, T, 1) int32
    tb, t_len, v_len = x.shape

    # mask = cat([ones(tb,1), (seq > 0)[:, :-1]], 1) == (prev_token > 0), prev[:,0]=1
    mask = (prev > 0).astype(jnp.float32)                  # (tb, T, 1)

    # output.gather(2, seq): lazy (1,1,V) lane-iota, broadcast compare, native-dtype
    # select; the V reduction accumulates in f32.
    vocab_ids = jax.lax.broadcasted_iota(jnp.int32, (1, 1, v_len), 2)
    hit = vocab_ids == seq                                 # (tb, T, V) bool
    picked = jnp.sum(jnp.where(hit, x, 0), axis=2, keepdims=True,
                     dtype=jnp.float32)                    # (tb, T, 1) f32

    pick_sum = jnp.sum(picked * mask, axis=1, keepdims=True)   # (tb, 1, 1)
    mask_sum = jnp.sum(mask, axis=1, keepdims=True)

    if compute_entropy:
        # H = -(softmax * log_softmax).sum(2) == log(s) - sum(ez*z)/s with z = x - max(x).
        # Element-wise ops stay in the native dtype (bf16 VALU/EUP on v6e/v7x);
        # the V-axis sums accumulate in f32.
        m = jnp.max(x, axis=2, keepdims=True)
        z = x - m
        ez = jnp.exp(z)
        s = jnp.sum(ez, axis=2, keepdims=True, dtype=jnp.float32)
        szz = jnp.sum(ez * z, axis=2, keepdims=True, dtype=jnp.float32)
        entropy = jnp.log(s) - szz / s                     # (tb, T, 1) f32
        ent_sum = jnp.sum(entropy * mask, axis=1, keepdims=True)
    else:
        ent_sum = jnp.zeros_like(pick_sum)

    # Single lane-dense store (one unmasked vst / writeback DMA per grid step).
    lane = jax.lax.broadcasted_iota(jnp.int32, (tb, 1, 128), 2)
    out_ref[...] = jnp.where(lane == 0, pick_sum,
                   jnp.where(lane == 1, ent_sum,
                   jnp.where(lane == 2, mask_sum, 0.0)))


def _structure_partials_vtiled_kernel(logits_ref, tok_ref, out_ref,
                                      m_sc, s_sc, szz_sc, pick_sc,
                                      *, compute_entropy):
    """Large-vocab fallback: grid = (batch tiles, vocab tiles).

    Online accumulation of (running max, sum exp, sum exp*z, picked logit) in VMEM
    scratch across the 'arbitrary' vocab axis; finalize + lane-dense store on the
    last vocab tile.
    """
    j = pl.program_id(1)
    nv = pl.num_programs(1)
    x = logits_ref[...]                                    # (tb, T, tv) native dtype
    seq = tok_ref[:, :, 0:1]                               # (tb, T, 1) int32
    tb, t_len, tv = x.shape

    @pl.when(j == 0)
    def _():
        # -1e30 (not -inf) keeps the j==0 rescale below NaN-free.
        m_sc[...] = jnp.full_like(m_sc, -1e30)
        s_sc[...] = jnp.zeros_like(s_sc)
        szz_sc[...] = jnp.zeros_like(szz_sc)
        pick_sc[...] = jnp.zeros_like(pick_sc)

    # picked-logit contribution of this vocab tile (lazy iota + global lane offset).
    vocab_ids = jax.lax.broadcasted_iota(jnp.int32, (1, 1, tv), 2) + j * tv
    hit = vocab_ids == seq
    pick_sc[...] += jnp.sum(jnp.where(hit, x, 0), axis=2, keepdims=True,
                            dtype=jnp.float32)

    if compute_entropy:
        xf = x.astype(jnp.float32)                         # per-V-tile upcast only
        m_old = m_sc[...]
        s_old = s_sc[...]
        m_new = jnp.maximum(m_old, jnp.max(xf, axis=2, keepdims=True))
        a = jnp.exp(m_old - m_new)
        z = xf - m_new
        ez = jnp.exp(z)
        s_sc[...] = a * s_old + jnp.sum(ez, axis=2, keepdims=True)
        szz_sc[...] = (a * szz_sc[...] + (m_old - m_new) * a * s_old
                       + jnp.sum(ez * z, axis=2, keepdims=True))
        m_sc[...] = m_new

    @pl.when(j == nv - 1)
    def _():
        prev = tok_ref[:, :, 1:2]
        mask = (prev > 0).astype(jnp.float32)              # (tb, T, 1)
        pick_sum = jnp.sum(pick_sc[...] * mask, axis=1, keepdims=True)
        mask_sum = jnp.sum(mask, axis=1, keepdims=True)
        if compute_entropy:
            s = s_sc[...]
            entropy = jnp.log(s) - szz_sc[...] / s
            ent_sum = jnp.sum(entropy * mask, axis=1, keepdims=True)
        else:
            ent_sum = jnp.zeros_like(pick_sum)
        lane = jax.lax.broadcasted_iota(jnp.int32, (tb, 1, 128), 2)
        out_ref[...] = jnp.where(lane == 0, pick_sum,
                       jnp.where(lane == 1, ent_sum,
                       jnp.where(lane == 2, mask_sum, 0.0)))


# ----------------------------------------------------------------------------
# VMEM-aware tiling
# ----------------------------------------------------------------------------
def _vmem_limit_bytes():
    """min(physical VMEM / 2, 64 MiB): 64 MiB on v5e/v6e (128 MiB), 32 MiB on v7x (64 MiB)."""
    cap = None
    try:
        cap = getattr(pltpu.get_tpu_info(), "vmem_capacity_bytes", None)
    except Exception:
        cap = None
    if not cap:
        cap = 64 * 1024 * 1024
    return int(min(cap // 2, 64 * 1024 * 1024))


def _per_sample_bytes(T, v, elem_bytes):
    # double-buffered logits block + element-wise temporaries (native-dtype select /
    # z / ez / ez*z plus f32 reduction temps) + padded token / output blocks.
    temp_per_elem = 4 * elem_bytes + 8
    return T * v * (2 * elem_bytes + temp_per_elem) + 2 * T * 128 * 4 + 2 * 128 * 4


def _plan_tiling(B, T, V, elem_bytes, vmem_limit, batch_tile=None, v_tile=None):
    budget = max(vmem_limit // 2, 1)

    if v_tile is not None:
        tv = int(v_tile)
        if tv != V and (V % tv != 0 or tv % 128 != 0):
            raise ValueError(f"v_tile={tv} must divide V={V} and be a multiple of 128")
    elif _per_sample_bytes(T, V, elem_bytes) <= budget or V % 128 != 0:
        tv = V                                    # single (T, V) slab per grid step
    else:
        # Large-vocab fallback: largest multiple of 128 dividing V such that a batch
        # tile of >= min(B, 8) samples still fits the budget (keeps sublanes dense).
        tb_target = min(B, 8)
        tv = 128
        for cand in range(128, V, 128):
            if V % cand == 0 and tb_target * _per_sample_bytes(T, cand, elem_bytes) <= budget:
                tv = cand

    if batch_tile is not None:
        tb = int(batch_tile)
    else:
        cap = max(1, budget // max(1, _per_sample_bytes(T, tv, elem_bytes)))
        if B >= 2:
            cap = max(1, min(cap, B // 2))        # keep >= 2 batch grid steps (v7x 2-TC split)
        tb = 1
        for cand in range(1, min(B, cap) + 1):
            if B % cand == 0:
                tb = cand
    if B % tb != 0:
        raise ValueError(f"batch_tile={tb} must divide B={B}")
    return tb, tv


# ----------------------------------------------------------------------------
# Wrapper
# ----------------------------------------------------------------------------
def structure_criterion_forward(output, sequence, reward_scores, self_cider_scores, *,
                                cider_reward_weight=1.0, bleu_reward_weight=0.0,
                                entropy_reward_weight=0.1, self_cider_reward_weight=0.1,
                                seq_per_img=1, batch_tile=None, v_tile=None):
    """JAX/Pallas equivalent of StructureCriterion.forward.

    `reward_scores` stands in for get_scores(target, sequence) (the CIDEr-D/BLEU mix,
    already combined with cider/bleu_reward_weight); `self_cider_scores` stands in for
    get_self_cider_scores(target, sequence).
    """
    # TODO(synk): CIDEr-D / BLEU / self-CIDEr run on decoded caption strings on the CPU
    # (external scorers + corpus document frequencies); no Pallas equivalent — the
    # per-sample rewards are precomputed and passed in.
    del cider_reward_weight, bleu_reward_weight

    B, T, V = output.shape
    elem_bytes = jnp.dtype(output.dtype).itemsize

    seq2d = sequence.astype(jnp.int32).reshape(B, T)
    # Previous token with a non-pad sentinel at t=0 -> mask = (prev > 0) in-kernel.
    prev2d = jnp.concatenate([jnp.ones((B, 1), jnp.int32), seq2d[:, :T - 1]], axis=1)
    tok = jnp.stack([seq2d, prev2d], axis=-1)              # (B, T, 2): one small input

    vmem_limit = _vmem_limit_bytes()
    tb, tv = _plan_tiling(B, T, V, elem_bytes, vmem_limit, batch_tile, v_tile)
    nv = V // tv

    compute_entropy = float(entropy_reward_weight) > 0

    cost = pl.CostEstimate(
        flops=8 * B * T * V,
        transcendentals=(B * T * V) if compute_entropy else 0,
        bytes_accessed=B * T * V * elem_bytes + B * T * 2 * 4 + B * 128 * 4)

    # TODO(synk): on v7x, pltpu.CORE_PARALLEL on the batch axis (or pl.core_map over
    # pltpu.create_tensorcore_mesh) would guarantee the 2-TensorCore split; "parallel"
    # is kept here for portability across v5e/v6e/v7x.
    cparams = pltpu.CompilerParams(
        dimension_semantics=("parallel",) if nv == 1 else ("parallel", "arbitrary"),
        vmem_limit_bytes=vmem_limit)

    out_shape = jax.ShapeDtypeStruct((B, 1, 128), jnp.float32)

    if nv == 1:
        kernel = functools.partial(_structure_partials_kernel,
                                   compute_entropy=compute_entropy)
        partials = pl.pallas_call(
            kernel,
            out_shape=out_shape,
            grid_spec=pltpu.PrefetchScalarGridSpec(
                num_scalar_prefetch=0,
                grid=(B // tb,),
                in_specs=[
                    pl.BlockSpec((tb, T, V), lambda i: (i, 0, 0)),   # logits (native dtype)
                    pl.BlockSpec((tb, T, 2), lambda i: (i, 0, 0)),   # packed (seq, prev)
                ],
                out_specs=pl.BlockSpec((tb, 1, 128), lambda i: (i, 0, 0)),
            ),
            compiler_params=cparams,
            cost_estimate=cost,
        )(output, tok)
    else:
        kernel = functools.partial(_structure_partials_vtiled_kernel,
                                   compute_entropy=compute_entropy)
        partials = pl.pallas_call(
            kernel,
            out_shape=out_shape,
            grid_spec=pltpu.PrefetchScalarGridSpec(
                num_scalar_prefetch=0,
                grid=(B // tb, nv),                        # vocab (reduction) axis last
                in_specs=[
                    pl.BlockSpec((tb, T, tv), lambda i, j: (i, 0, j)),
                    pl.BlockSpec((tb, T, 2), lambda i, j: (i, 0, 0)),
                ],
                out_specs=pl.BlockSpec((tb, 1, 128), lambda i, j: (i, 0, 0)),
                scratch_shapes=[pltpu.VMEM((tb, T, 1), jnp.float32)] * 4,
            ),
            compiler_params=cparams,
            cost_estimate=cost,
        )(output, tok)

    s_pick = partials[:, 0, 0]
    s_ent = partials[:, 0, 1]
    s_mask = partials[:, 0, 2]

    # O(B) score algebra on per-sample partials (negligible vs. the kernel's HBM traffic).
    reward = jnp.reshape(reward_scores, (-1, 1)).astype(jnp.float32)
    scores = reward[:, 0]
    if compute_entropy:
        scores = scores + entropy_reward_weight * (s_ent / s_mask)
    # Leave-one-out baseline over the seq_per_img group; the reference PyTorch code uses
    # view(-1, 1) (K == 1), for which the baseline is exactly zero.
    K = int(seq_per_img)
    sc = scores.reshape(-1, K)
    baseline = (jnp.sum(sc, axis=1, keepdims=True) - sc) / K
    scores = (sc - baseline).reshape(-1)
    if float(self_cider_reward_weight) > 0:
        scores = scores + self_cider_reward_weight * jnp.reshape(
            self_cider_scores, (-1,)).astype(jnp.float32)

    loss = jnp.sum(-s_pick * scores) / jnp.sum(s_mask)
    return {"reward": reward, "loss": loss}


# ----------------------------------------------------------------------------
# Pure-JAX reference (mirrors the PyTorch forward) for verification
# ----------------------------------------------------------------------------
def _reference_forward(output, sequence, reward_scores, self_cider_scores,
                       entropy_reward_weight, self_cider_reward_weight):
    B, T, V = output.shape
    output = output.astype(jnp.float32)
    mask = (sequence > 0).astype(output.dtype)
    mask = jnp.concatenate([jnp.ones((B, 1), output.dtype), mask[:, :-1]], axis=1)
    scores = jnp.reshape(reward_scores, (-1, 1)).astype(output.dtype)
    if entropy_reward_weight > 0:
        ent = -(jax.nn.softmax(output, axis=2) * jax.nn.log_softmax(output, axis=2)).sum(2)
        ent = (ent * mask).sum(1) / mask.sum(1)
        scores = scores + entropy_reward_weight * ent[:, None]
    picked = jnp.take_along_axis(output, sequence[:, :, None], axis=2)[:, :, 0]
    baseline = (scores.sum(1, keepdims=True) - scores) / scores.shape[1]
    scores = scores - baseline
    if self_cider_reward_weight > 0:
        scores = scores + self_cider_reward_weight * jnp.reshape(self_cider_scores, (-1, 1))
    loss = -picked * mask * scores
    return jnp.sum(loss) / jnp.sum(mask)


if __name__ == "__main__":
    key = jax.random.PRNGKey(0)
    k1, k2, k3, k4 = jax.random.split(key, 4)

    # Case 1: small unaligned vocab (V=32), f32 logits.
    B, T, V = 2, 8, 32
    output = jax.random.normal(k1, (B, T, V), dtype=jnp.float32)       # logits
    sequence = jax.random.randint(k2, (B, T), 0, V, dtype=jnp.int32)   # sampled tokens (0=pad)
    reward_scores = jax.random.uniform(k3, (B,), dtype=jnp.float32)        # CIDEr-D/BLEU stand-in
    self_cider_scores = jax.random.uniform(k4, (B,), dtype=jnp.float32)    # self-CIDEr stand-in

    out = structure_criterion_forward(
        output, sequence, reward_scores, self_cider_scores,
        entropy_reward_weight=0.1, self_cider_reward_weight=0.1)
    loss = jax.block_until_ready(out["loss"])
    ref = jax.block_until_ready(_reference_forward(
        output, sequence, reward_scores, self_cider_scores, 0.1, 0.1))
    np.testing.assert_allclose(np.asarray(loss), np.asarray(ref), rtol=1e-5, atol=1e-5)

    # Case 1b: bf16 logits fed straight to the kernel (bf16 element-wise math,
    # f32 accumulation), so the tolerance is bf16-level.
    out_bf16 = structure_criterion_forward(
        output.astype(jnp.bfloat16), sequence, reward_scores, self_cider_scores,
        entropy_reward_weight=0.1, self_cider_reward_weight=0.1)
    loss_bf16 = jax.block_until_ready(out_bf16["loss"])
    ref_bf16 = jax.block_until_ready(_reference_forward(
        output.astype(jnp.bfloat16).astype(jnp.float32), sequence,
        reward_scores, self_cider_scores, 0.1, 0.1))
    np.testing.assert_allclose(np.asarray(loss_bf16), np.asarray(ref_bf16),
                               rtol=3e-2, atol=3e-2)

    # Case 2: lane-aligned vocab (V=128), multi-step batch grid (batch_tile=2 -> 2 steps).
    k5, k6, k7, k8 = jax.random.split(jax.random.PRNGKey(1), 4)
    B2, T2, V2 = 4, 8, 128
    output2 = jax.random.normal(k5, (B2, T2, V2), dtype=jnp.float32)
    sequence2 = jax.random.randint(k6, (B2, T2), 0, V2, dtype=jnp.int32)
    reward2 = jax.random.uniform(k7, (B2,), dtype=jnp.float32)
    selfc2 = jax.random.uniform(k8, (B2,), dtype=jnp.float32)
    out2 = structure_criterion_forward(
        output2, sequence2, reward2, selfc2,
        entropy_reward_weight=0.1, self_cider_reward_weight=0.1, batch_tile=2)
    loss2 = jax.block_until_ready(out2["loss"])
    ref2 = jax.block_until_ready(_reference_forward(output2, sequence2, reward2, selfc2,
                                                    0.1, 0.1))
    np.testing.assert_allclose(np.asarray(loss2), np.asarray(ref2), rtol=1e-5, atol=1e-5)

    # Case 3: V-tiled fallback path (V=256 split into 2 vocab tiles, online accumulation).
    k9, k10, k11, k12 = jax.random.split(jax.random.PRNGKey(2), 4)
    B3, T3, V3 = 2, 8, 256
    output3 = jax.random.normal(k9, (B3, T3, V3), dtype=jnp.float32)
    sequence3 = jax.random.randint(k10, (B3, T3), 0, V3, dtype=jnp.int32)
    reward3 = jax.random.uniform(k11, (B3,), dtype=jnp.float32)
    selfc3 = jax.random.uniform(k12, (B3,), dtype=jnp.float32)
    out3 = structure_criterion_forward(
        output3, sequence3, reward3, selfc3,
        entropy_reward_weight=0.1, self_cider_reward_weight=0.1, v_tile=128)
    loss3 = jax.block_until_ready(out3["loss"])
    ref3 = jax.block_until_ready(_reference_forward(output3, sequence3, reward3, selfc3,
                                                    0.1, 0.1))
    np.testing.assert_allclose(np.asarray(loss3), np.asarray(ref3), rtol=1e-4, atol=1e-4)

    # Case 4: unaligned V with all-negative logits (checks lane padding is
    # reduction-masked in max / exp sums, per the review's correctness concern).
    k13, k14, k15, k16 = jax.random.split(jax.random.PRNGKey(3), 4)
    B4, T4, V4 = 2, 8, 48
    output4 = -jnp.abs(jax.random.normal(k13, (B4, T4, V4), dtype=jnp.float32)) - 0.5
    sequence4 = jax.random.randint(k14, (B4, T4), 0, V4, dtype=jnp.int32)
    reward4 = jax.random.uniform(k15, (B4,), dtype=jnp.float32)
    selfc4 = jax.random.uniform(k16, (B4,), dtype=jnp.float32)
    out4 = structure_criterion_forward(
        output4, sequence4, reward4, selfc4,
        entropy_reward_weight=0.1, self_cider_reward_weight=0.1)
    loss4 = jax.block_until_ready(out4["loss"])
    ref4 = jax.block_until_ready(_reference_forward(output4, sequence4, reward4, selfc4,
                                                    0.1, 0.1))
    np.testing.assert_allclose(np.asarray(loss4), np.asarray(ref4), rtol=1e-5, atol=1e-5)

    print("KERNEL_OK")
</pallas_src>

<mosaic_0001>
module attributes {stable_mosaic.version = 11 : i64} {
  func.func @_structure_partials_kernel(%arg0: i32, %arg1: memref<1x8x32xf32, #tpu.memory_space<vmem>>, %arg2: memref<1x8x2xi32, #tpu.memory_space<vmem>>, %arg3: memref<1x1x128xf32, #tpu.memory_space<vmem>>) attributes {dimension_semantics = [#tpu.dimension_semantics<parallel>], iteration_bounds = array<i64: 2>, scalar_prefetch = 0 : i64, scratch_operands = 0 : i64, tpu.core_type = #tpu.core_type<tc>, window_params = [{transform_indices = @transform_0, window_bounds = array<i64: 1, 8, 32>}, {transform_indices = @transform_1, window_bounds = array<i64: 1, 8, 2>}, {transform_indices = @transform_2, window_bounds = array<i64: 1, 1, 128>}]} {
    %c0 = arith.constant 0 : index
    %c0_0 = arith.constant 0 : index
    %c0_1 = arith.constant 0 : index
    %0 = vector.load %arg1[%c0, %c0_0, %c0_1] : memref<1x8x32xf32, #tpu.memory_space<vmem>>, vector<1x8x32xf32>
    %c0_2 = arith.constant 0 : index
    %c0_3 = arith.constant 0 : index
    %c0_4 = arith.constant 0 : index
    %1 = vector.load %arg2[%c0_2, %c0_3, %c0_4] : memref<1x8x2xi32, #tpu.memory_space<vmem>>, vector<1x8x1xi32>
    %c0_5 = arith.constant 0 : index
    %c0_6 = arith.constant 0 : index
    %c1 = arith.constant 1 : index
    %2 = vector.load %arg2[%c0_5, %c0_6, %c1] : memref<1x8x2xi32, #tpu.memory_space<vmem>>, vector<1x8x1xi32>
    %c0_i32 = arith.constant 0 : i32
    %3 = vector.broadcast %c0_i32 : i32 to vector<1x8x1xi32>
    %4 = arith.cmpi sgt, %2, %3 : vector<1x8x1xi32>
    %5 = arith.extui %4 : vector<1x8x1xi1> to vector<1x8x1xi32>
    %6 = arith.sitofp %5 : vector<1x8x1xi32> to vector<1x8x1xf32>
    %7 = tpu.iota {dimensions = array<i32: 2>} : vector<1x1x32xi32>
    %8 = vector.broadcast %7 : vector<1x1x32xi32> to vector<1x8x32xi32>
    %9 = vector.broadcast %1 : vector<1x8x1xi32> to vector<1x8x32xi32>
    %10 = arith.cmpi eq, %8, %9 : vector<1x8x32xi32>
    %c0_i32_7 = arith.constant 0 : i32
    %11 = arith.sitofp %c0_i32_7 : i32 to f32
    %12 = vector.broadcast %11 : f32 to vector<1x8x32xf32>
    %13 = arith.select %10, %0, %12 : vector<1x8x32xi1>, vector<1x8x32xf32>
    %cst = arith.constant dense<0.000000e+00> : vector<1x8xf32>
    %14 = vector.multi_reduction <add>, %13, %cst [2] : vector<1x8x32xf32> to vector<1x8xf32>
    %15 = vector.shape_cast %14 : vector<1x8xf32> to vector<1x8x1xf32>
    %16 = arith.mulf %15, %6 : vector<1x8x1xf32>
    %cst_8 = arith.constant dense<0.000000e+00> : vector<1x1xf32>
    %17 = vector.multi_reduction <add>, %16, %cst_8 [1] : vector<1x8x1xf32> to vector<1x1xf32>
    %18 = vector.shape_cast %17 : vector<1x1xf32> to vector<1x1x1xf32>
    %cst_9 = arith.constant dense<0.000000e+00> : vector<1x1xf32>
    %19 = vector.multi_reduction <add>, %6, %cst_9 [1] : vector<1x8x1xf32> to vector<1x1xf32>
    %20 = vector.shape_cast %19 : vector<1x1xf32> to vector<1x1x1xf32>
    %cst_10 = arith.constant dense<0xFF800000> : vector<1x8xf32>
    %21 = vector.multi_reduction <maximumf>, %0, %cst_10 [2] : vector<1x8x32xf32> to vector<1x8xf32>
    %22 = vector.shape_cast %21 : vector<1x8xf32> to vector<1x8x1xf32>
    %23 = vector.broadcast %22 : vector<1x8x1xf32> to vector<1x8x32xf32>
    %24 = arith.subf %0, %23 : vector<1x8x32xf32>
    %25 = math.exp %24 : vector<1x8x32xf32>
    %cst_11 = arith.constant dense<0.000000e+00> : vector<1x8xf32>
    %26 = vector.multi_reduction <add>, %25, %cst_11 [2] : vector<1x8x32xf32> to vector<1x8xf32>
    %27 = vector.shape_cast %26 : vector<1x8xf32> to vector<1x8x1xf32>
    %28 = arith.mulf %25, %24 : vector<1x8x32xf32>
    %cst_12 = arith.constant dense<0.000000e+00> : vector<1x8xf32>
    %29 = vector.multi_reduction <add>, %28, %cst_12 [2] : vector<1x8x32xf32> to vector<1x8xf32>
    %30 = vector.shape_cast %29 : vector<1x8xf32> to vector<1x8x1xf32>
    %31 = math.log %27 : vector<1x8x1xf32>
    %32 = arith.divf %30, %27 : vector<1x8x1xf32>
    %33 = arith.subf %31, %32 : vector<1x8x1xf32>
    %34 = arith.mulf %33, %6 : vector<1x8x1xf32>
    %cst_13 = arith.constant dense<0.000000e+00> : vector<1x1xf32>
    %35 = vector.multi_reduction <add>, %34, %cst_13 [1] : vector<1x8x1xf32> to vector<1x1xf32>
    %36 = vector.shape_cast %35 : vector<1x1xf32> to vector<1x1x1xf32>
    %37 = tpu.iota {dimensions = array<i32: 2>} : vector<1x1x128xi32>
    %c0_i32_14 = arith.constant 0 : i32
    %38 = vector.broadcast %c0_i32_14 : i32 to vector<1x1x128xi32>
    %39 = arith.cmpi eq, %37, %38 : vector<1x1x128xi32>
    %c1_i32 = arith.constant 1 : i32
    %40 = vector.broadcast %c1_i32 : i32 to vector<1x1x128xi32>
    %41 = arith.cmpi eq, %37, %40 : vector<1x1x128xi32>
    %c2_i32 = arith.constant 2 : i32
    %42 = vector.broadcast %c2_i32 : i32 to vector<1x1x128xi32>
    %43 = arith.cmpi eq, %37, %42 : vector<1x1x128xi32>
    %cst_15 = arith.constant 0.000000e+00 : f32
    %44 = vector.shape_cast %20 : vector<1x1x1xf32> to vector<1x1x1xf32>
    %45 = vector.broadcast %44 : vector<1x1x1xf32> to vector<1x1x128xf32>
    %46 = vector.broadcast %cst_15 : f32 to vector<1x1x128xf32>
    %47 = arith.select %43, %45, %46 : vector<1x1x128xi1>, vector<1x1x128xf32>
    %48 = vector.shape_cast %36 : vector<1x1x1xf32> to vector<1x1x1xf32>
    %49 = vector.broadcast %48 : vector<1x1x1xf32> to vector<1x1x128xf32>
    %50 = arith.select %41, %49, %47 : vector<1x1x128xi1>, vector<1x1x128xf32>
    %51 = vector.shape_cast %18 : vector<1x1x1xf32> to vector<1x1x1xf32>
    %52 = vector.broadcast %51 : vector<1x1x1xf32> to vector<1x1x128xf32>
    %53 = arith.select %39, %52, %50 : vector<1x1x128xi1>, vector<1x1x128xf32>
    %c0_16 = arith.constant 0 : index
    %c0_17 = arith.constant 0 : index
    %c0_18 = arith.constant 0 : index
    %54 = vector.load %arg3[%c0_16, %c0_17, %c0_18] : memref<1x1x128xf32, #tpu.memory_space<vmem>>, vector<1x1x128xf32>
    tpu.vector_store %arg3[%c0_16, %c0_17, %c0_18], %53 {strides = array<i32>} : memref<1x1x128xf32, #tpu.memory_space<vmem>>, vector<1x1x128xf32>,
    return
  }
  func.func @transform_0(%arg0: i32) -> (i32, i32, i32) {
    %c0_i32 = arith.constant 0 : i32
    %c0_i32_0 = arith.constant 0 : i32
    %c0_i32_1 = arith.constant 0 : i32
    return %arg0, %c0_i32, %c0_i32_0 : i32, i32, i32
  }
  func.func @transform_1(%arg0: i32) -> (i32, i32, i32) {
    %c0_i32 = arith.constant 0 : i32
    %c0_i32_0 = arith.constant 0 : i32
    %c0_i32_1 = arith.constant 0 : i32
    return %arg0, %c0_i32, %c0_i32_0 : i32, i32, i32
  }
  func.func @transform_2(%arg0: i32) -> (i32, i32, i32) {
    %c0_i32 = arith.constant 0 : i32
    %c0_i32_0 = arith.constant 0 : i32
    %c0_i32_1 = arith.constant 0 : i32
    return %arg0, %c0_i32, %c0_i32_0 : i32, i32, i32
  }
}

</mosaic_0001>

<llo_original>
// kernel: tpu_custom_call.1
$region0: #{tpu_custom_call.1}
  #allocation0 [shape = 'u32[]', space=smem, size = 0x4, offset = 0x4, fixed_abs, tag = 'smem constant byte address 0x4 - core index']
  #allocation1 [shape = 'u32[144,128]{1,0:T(1,128)}', space=vmem, size = 0x12000, scoped, tag = 'internal scratch']
  %s0 = inlined_call_operand.vmem [shape: f32[2,8,32], index: 0, kind: input, shape index: {}]
  %s1 = inlined_call_operand.vmem [shape: s32[2,8,2], index: 1, kind: input, shape index: {}]
  %s2 = inlined_call_operand.hbm [shape: f32[2,1,128], index: 2, kind: output, shape index: {}]
  %s3 = sld [smem:[#allocation0]]
  $region41: #{tpu_custom_call.1} parent=0
    _
  %s5 = ssub.s32 1, %s3
  %s6 = scalar_select 0, %s5, %s3
  $region1: #{tpu_custom_call.1} parent=0
    #allocation2 [shape = 'u8[1024]{0}', space=vmem, size = 0x400, scoped, tag = 'output window, operand 0']
    #allocation3 [shape = 's32[2]{0}', space=sflag, size = 0x8, scoped, tag = 'scoped memory for tpu_custom_call.1']
    %7 = vsyncpa [#allocation3], 0
    %s8 = scalar_lea.sflag [#allocation3], 1
    %9 = vsyncpa %s8, 0
    loop: start=0, step=1, limit=4
    $region2: #{tpu_custom_call.1} parent=1 // loop_pre_header
      _
    $region3: #{tpu_custom_call.1} parent=1 // loop_header
      %s11 = sphi 0, %s15
      %p12 = scmp.ge.s32.totalorder %s11, 4
      %s21 = sphi 0, %s23
      %s24 = sphi 0, %s21
      %s25 = sphi 0, %s24
      %s41 = sphi 0, %s25
      %s47 = sphi 0, %s49
      %s50 = sphi 0, %s47
      %s51 = sphi 0, %s50
      %s67 = sphi 0, %s51
      %s73 = sphi 0, %s75
      %s76 = sphi 0, %s73
      %s77 = sphi 0, %s76
      %s93 = sphi 0, %s77
    $region4: #{tpu_custom_call.1} parent=1 // loop_header_branch
      %14 = sbr.rel (%p12) target = $region8
    $region5: #{tpu_custom_call.1} parent=1 // loop_body
      %s16 = ssub.s32 %s11, 1
      %s17 = ssub.s32 %s11, 2
      %s18 = sadd.s32 %s11, 1
      %s19 = ssub.s32 %s11, %s18
      %p20 = scmp.eq.s32.totalorder %s19, 0
      %s22 = sadd.s32 %s21, 1
      %s23 = scalar_select %p20, %s21, %s22
      %p26 = pneg %p20
      %p27 = scmp.eq.s32.totalorder %s11, 1
      %p28 = por %p26, %p27
      %p29 = scmp.ne.s32.totalorder %s21, %s24
      %p30 = scmp.eq.s32.totalorder %s11, 0
      %p31 = por %p29, %p30
      %p32 = scmp.ne.s32.totalorder %s21, %s24
      %p33 = scmp.eq.s32.totalorder %s16, 1
      %p34 = por %p32, %p33
      %p35 = scmp.ne.s32.totalorder %s24, %s25
      %p36 = scmp.eq.s32.totalorder %s16, 0
      %p37 = por %p35, %p36
      %p38 = scmp.ne.s32.totalorder %s24, %s25
      %p39 = scmp.eq.s32.totalorder %s17, 1
      %p40 = por %p38, %p39
      %p42 = scmp.ne.s32.totalorder %s25, %s41
      %p43 = scmp.eq.s32.totalorder %s17, 0
      %p44 = por %p42, %p43
      %s45 = ssub.s32 %s11, %s18
      %p46 = scmp.eq.s32.totalorder %s45, 0
      %s48 = sadd.s32 %s47, 1
      %s49 = scalar_select %p46, %s47, %s48
      %p52 = pneg %p46
      %p53 = scmp.eq.s32.totalorder %s11, 1
      %p54 = por %p52, %p53
      %p55 = scmp.ne.s32.totalorder %s47, %s50
      %p56 = scmp.eq.s32.totalorder %s11, 0
      %p57 = por %p55, %p56
      %p58 = scmp.ne.s32.totalorder %s47, %s50
      %p59 = scmp.eq.s32.totalorder %s16, 1
      %p60 = por %p58, %p59
      %p61 = scmp.ne.s32.totalorder %s50, %s51
      %p62 = scmp.eq.s32.totalorder %s16, 0
      %p63 = por %p61, %p62
      %p64 = scmp.ne.s32.totalorder %s50, %s51
      %p65 = scmp.eq.s32.totalorder %s17, 1
      %p66 = por %p64, %p65
      %p68 = scmp.ne.s32.totalorder %s51, %s67
      %p69 = scmp.eq.s32.totalorder %s17, 0
      %p70 = por %p68, %p69
      %s71 = ssub.s32 %s11, %s18
      %p72 = scmp.eq.s32.totalorder %s71, 0
      %s74 = sadd.s32 %s73, 1
      %s75 = scalar_select %p72, %s73, %s74
      %p78 = pneg %p72
      %p79 = scmp.eq.s32.totalorder %s11, 1
      %p80 = por %p78, %p79
      %p81 = scmp.ne.s32.totalorder %s73, %s76
      %p82 = scmp.eq.s32.totalorder %s11, 0
      %p83 = por %p81, %p82
      %p84 = scmp.ne.s32.totalorder %s73, %s76
      %p85 = scmp.eq.s32.totalorder %s16, 1
      %p86 = por %p84, %p85
      %p87 = scmp.ne.s32.totalorder %s76, %s77
      %p88 = scmp.eq.s32.totalorder %s16, 0
      %p89 = por %p87, %p88
      %p90 = scmp.ne.s32.totalorder %s76, %s77
      %p91 = scmp.eq.s32.totalorder %s17, 1
      %p92 = por %p90, %p91
      %p94 = scmp.ne.s32.totalorder %s77, %s93
      %p95 = scmp.eq.s32.totalorder %s17, 0
      %p96 = por %p94, %p95
      %p97 = scmp.le.s32.totalorder 1, %s11
      %p98 = scmp.lt.s32.totalorder %s11, 3
      %p99 = pnand %p97, %p98
      %p100 = pneg %p99
      // Predicated region
      $region9: #{tpu_custom_call.1} parent=5 // pred_check
        _
      $region10: #{tpu_custom_call.1} parent=5 // pred_check_branch
        %102 = sbr.rel (%p99) target = $region12
      $region11: #{tpu_custom_call.1} parent=5 // pred_region
        %s103 = ssub.s32 %s11, 1
      $region12: #{tpu_custom_call.1} parent=5 // pred_fallthru
        _
      %p104 = scmp.lt.s32.totalorder %s11, 2
      // Predicated region
      $region13: #{tpu_custom_call.1} parent=5 // pred_check
        %p105 = pneg %p104
      $region14: #{tpu_custom_call.1} parent=5 // pred_check_branch
        %107 = sbr.rel (%p105) target = $region16
      $region15: #{tpu_custom_call.1} parent=5 // pred_region
        // Predicated region
        $region17: #{tpu_custom_call.1} parent=15 // pred_check
          %p108 = pneg %p31
        $region18: #{tpu_custom_call.1} parent=15 // pred_check_branch
          %110 = sbr.rel (%p108) target = $region20
        $region19: #{tpu_custom_call.1} parent=15 // pred_region
          %p111 = scmp.lt.s32.totalorder %s11, 1
          %s112 = scalar_select %p111, %s11, 1
          %s113 = smul.addr %s112, 8
          %s114 = scalar_lea.vmem %s0, %s113
        $region20: #{tpu_custom_call.1} parent=15 // pred_fallthru
          _
        // Predicated region
        $region21: #{tpu_custom_call.1} parent=15 // pred_check
          %p115 = pneg %p57
        $region22: #{tpu_custom_call.1} parent=15 // pred_check_branch
          %117 = sbr.rel (%p115) target = $region24
        $region23: #{tpu_custom_call.1} parent=15 // pred_region
          %p118 = scmp.lt.s32.totalorder %s11, 1
          %s119 = scalar_select %p118, %s11, 1
          %s120 = smul.addr %s119, 8
          %s121 = scalar_lea.vmem %s1, %s120
        $region24: #{tpu_custom_call.1} parent=15 // pred_fallthru
          _
      $region16: #{tpu_custom_call.1} parent=5 // pred_fallthru
        _
      %p122 = scmp.le.s32.totalorder 1, %s11
      %p123 = scmp.lt.s32.totalorder %s11, 3
      %p124 = pnand %p122, %p123
      %p125 = pneg %p124
      // Predicated region
      $region25: #{tpu_custom_call.1} parent=5 // pred_check
        _
      $region26: #{tpu_custom_call.1} parent=5 // pred_check_branch
        %127 = sbr.rel (%p124) target = $region28
      $region27: #{tpu_custom_call.1} parent=5 // pred_region
        %s128 = ssub.s32 %s11, 1
        %p129 = scmp.lt.s32.totalorder %s16, 1
        %s130 = scalar_select %p129, %s16, 1
        %s131 = smul.addr %s130, 8
        %s132 = scalar_lea.vmem %s0, %s131
        %p133 = pneg %p37
        %p134 = pneg %p34
        %p135 = scmp.lt.s32.totalorder %s16, 1
        %s136 = scalar_select %p135, %s16, 1
        %s137 = smul.addr %s136, 8
        %s138 = scalar_lea.vmem %s1, %s137
        %p139 = pneg %p63
        %p140 = pneg %p60
        %p141 = pneg %p89
        %p142 = pneg %p86
        %s143 = sand.u32 %s76, 1
        %s144 = scalar_lea.sflag [#allocation3], %s143
        %s145 = sand.u32 %s76, 1
        %s146 = scalar_lea.vmem [#allocation2], %s145
        %p147 = scmp.lt.s32.totalorder %s16, 1
        %s148 = scalar_select %p147, %s16, 1
        %s149 = smul.addr %s148, 8
        %s150 = scalar_lea.vmem %s0, %s149
        %p151 = scmp.lt.s32.totalorder %s16, 1
        %s152 = scalar_select %p151, %s16, 1
        %s153 = smul.addr %s152, 8
        %s154 = scalar_lea.vmem %s1, %s153
        %v155 = vld [vmem:[%s150] sm:$0xff]
        %v156 = vld [vmem:[%s154] sm:$0xff]
        %vm157 = vcmp.gt.s32.totalorder %v156, 0
        %v158 = vsel %vm157, 1, 0
        %v159 = vcvt.s32.f32 %v158
        %v160 = vlaneseq
        %v161 = vand.u32 %v160, 127
        %162 = vset.pattern.permute.xlu0 0
        %163 = vperm.xlu0 %162, %v156
        %v164 = vpop.permute.xlu0 %163
        %vm165 = vcmp.eq.s32.totalorder %v161, %v164
        %v166 = vsel %vm165, %v155, 0.0
        %vm167 = vcmask 261120
        %v168 = vsel %vm167, %v166, 0.0
        %169 = vadd.xlane.f32.xlu0 %v168
        %v170 = vpop.xlane.xlu0 %169
        %v171 = vmul.f32 %v170, %v159
        %vm172 = vcmask 15368
        %v173 = vsel %vm172, %v171, 0.0
        %v174 = vrot.slane %v173, 4
        %v175 = vadd.f32 %v173, %v174
        %v176 = vrot.slane %v175, 2
        %v177 = vadd.f32 %v175, %v176
        %v178 = vrot.slane %v177, 1
        %v179 = vadd.f32 %v177, %v178
        %v180 = vsel %vm172, %v159, 0.0
        %v181 = vrot.slane %v180, 4
        %v182 = vadd.f32 %v180, %v181
        %v183 = vrot.slane %v182, 2
        %v184 = vadd.f32 %v182, %v183
        %v185 = vrot.slane %v184, 1
        %v186 = vadd.f32 %v184, %v185
        %v187 = vsel %vm167, %v155, -inf
        %188 = vmax.xlane.f32.xlu0 %v187
        %v189 = vpop.xlane.xlu0 %188
        %v190 = vsub.f32 %v155, %v189
        %v191 = vmul.f32 %v190, 1.442695
        %v192 = vpow.pop %v191
        %v193 = vsel %vm167, %v192, 0.0
        %194 = vadd.xlane.f32.xlu0 %v193
        %v195 = vpop.xlane.xlu0 %194
        %v196 = vmul.f32 %v192, %v190
        %v197 = vsel %vm167, %v196, 0.0
        %198 = vadd.xlane.f32.xlu0 %v197
        %v199 = vpop.xlane.xlu0 %198
        %v200 = vlog2.pop %v195
        %v201 = vmul.f32 %v200, 0.6931472
        %v202 = vrcp.pop %v195
        %v203 = vmul.f32 %v199, %v202
        %v204 = vsub.f32 %v201, %v203
        %v205 = vmul.f32 %v204, %v159
        %v206 = vsel %vm172, %v205, 0.0
        %v207 = vrot.slane %v206, 4
        %v208 = vadd.f32 %v206, %v207
        %v209 = vrot.slane %v208, 2
        %v210 = vadd.f32 %v208, %v209
        %v211 = vrot.slane %v210, 1
        %v212 = vadd.f32 %v210, %v211
        %vm213 = vcmp.eq.s32.totalorder %v161, 0
        %vm214 = vcmp.eq.s32.totalorder %v161, 1
        %vm215 = vcmp.eq.s32.totalorder %v161, 2
        %217 = vset.pattern.permute.xlu0 1
        %218 = vperm.xlu0 %217, %v186
        %v219 = vpop.permute.xlu0 %218
        %v221 = vsel %vm215, %v219, 0.0
        %223 = vset.pattern.permute.xlu0 1
        %224 = vperm.xlu0 %223, %v212
        %v225 = vpop.permute.xlu0 %224
        %v227 = vsel %vm214, %v225, %v221
        %229 = vset.pattern.permute.xlu0 1
        %230 = vperm.xlu0 %229, %v179
        %v231 = vpop.permute.xlu0 %230
        %v233 = vsel %vm213, %v231, %v227
        %234 = vst [vmem:[%s146] sm:$0x1] %v233
        %s235 = sand.u32 %s76, 1
        %s236 = scalar_lea.sflag [#allocation3], %s235
        %s237 = sand.u32 %s76, 1
        %s238 = scalar_lea.vmem [#allocation2], %s237
        // Predicated region
        $region29: #{tpu_custom_call.1} parent=27 // pred_check
          %p239 = pneg %p86
        $region30: #{tpu_custom_call.1} parent=27 // pred_check_branch
          %241 = sbr.rel (%p239) target = $region32
        $region31: #{tpu_custom_call.1} parent=27 // pred_region
          %s243 = ssub.s32 16, 16
          %244 = vsyncadd %s236, %s243
          %s245 = smul.addr %s16, 16
          %s246 = scalar_lea.hbm %s2, %s245
          %s248 = sshll.u32 %s238, 4
          %s249 = int_to_ptr.vmem [resolvable:$true] %s248
          %251 = dma.vmem_to_hbm [thread:$0]  %s249, 16, %s246, %s236
        $region32: #{tpu_custom_call.1} parent=27 // pred_fallthru
          _
      $region28: #{tpu_custom_call.1} parent=5 // pred_fallthru
        _
      %p252 = scmp.le.s32.totalorder 2, %s11
      // Predicated region
      $region33: #{tpu_custom_call.1} parent=5 // pred_check
        %p253 = pneg %p252
      $region34: #{tpu_custom_call.1} parent=5 // pred_check_branch
        %255 = sbr.rel (%p253) target = $region36
      $region35: #{tpu_custom_call.1} parent=5 // pred_region
        %s256 = ssub.s32 %s11, 2
        // Predicated region
        $region37: #{tpu_custom_call.1} parent=35 // pred_check
          %p257 = pneg %p92
        $region38: #{tpu_custom_call.1} parent=35 // pred_check_branch
          %259 = sbr.rel (%p257) target = $region40
        $region39: #{tpu_custom_call.1} parent=35 // pred_region
          %s260 = sand.u32 %s77, 1
          %s261 = scalar_lea.sflag [#allocation3], %s260
          %s262 = sand.u32 %s77, 1
          %s263 = scalar_lea.vmem [#allocation2], %s262
          %264 = dma.done %s261, 16
        $region40: #{tpu_custom_call.1} parent=35 // pred_fallthru
          _
      $region36: #{tpu_custom_call.1} parent=5 // pred_fallthru
        _
    $region6: #{tpu_custom_call.1} parent=1 // loop_footer
      %s15 = sadd.s32 1, %s11
    $region7: #{tpu_custom_call.1} parent=1 // loop_footer_branch
      %10 = sbr.rel target = $region3
    $region8: #{tpu_custom_call.1} parent=1 // loop_exit
      _
    %265 = vsyncpa [#allocation3], 1
    %s266 = scalar_lea.sflag [#allocation3], 1
    %267 = vsyncpa %s266, 1

</llo_original>
